<compile_context>
chip_gen: v5e
topology: v5e:2x2
jax: 0.10.0
libtpu: 0.0.40
codegen_flags: <defaults>
</compile_context>

<pallas_src>
import jax
import jax.numpy as jnp
from jax.experimental import pallas as pl
from jax.experimental.pallas import tpu as pltpu


def dqn_kernel(x_ref, w1_ref, b1_ref, w2_ref, b2_ref, w3_ref, b3_ref, o_ref):
    # Compute dtype follows the (pre-cast) weights; x is cast in-kernel (VPU),
    # avoiding a wrapper-side astype that would double x's HBM traffic.
    cdt = w1_ref.dtype
    x = x_ref[...].astype(cdt)

    # Layer 1: Linear(200 -> 64) + ReLU   (f32 MXU accumulation)
    h1 = jnp.dot(x, w1_ref[...], preferred_element_type=jnp.float32)
    h1 = jnp.maximum(h1 + b1_ref[...], 0.0)

    # Layer 2: Linear(64 -> 64) + ReLU
    h2 = jnp.dot(h1.astype(cdt), w2_ref[...], preferred_element_type=jnp.float32)
    h2 = jnp.maximum(h2 + b2_ref[...], 0.0)

    # Layer 3: Linear(64 -> 6), no activation
    out = jnp.dot(h2.astype(cdt), w3_ref[...], preferred_element_type=jnp.float32)
    o_ref[...] = (out + b3_ref[...]).astype(o_ref.dtype)


def _round_up(x, m):
    return ((x + m - 1) // m) * m


def deep_q_network(x, w1, b1, w2, b2, w3, b3, *,
                   tile_b=4096, single_block_max=4096):
    """Fused DQN forward pass.

    Batches up to `single_block_max` rows run as one ungridded VMEM block
    (latency path). Larger batches stream x over a 1-D batch grid with the
    weights/biases VMEM-resident (constant index_map), batch axis "parallel"
    so v7x's two TensorCores split it.
    Weights are expected pre-cast to the desired compute dtype (see
    cast_params); x may be any float dtype and is cast inside the kernel.
    """
    B, d_in = x.shape
    out_dim = w3.shape[1]

    operands = (x, w1, b1, w2, b2, w3, b3)
    out_shape = jax.ShapeDtypeStruct((B, out_dim), jnp.float32)

    flops = 2 * B * (d_in * 64 + 64 * 64 + 64 * out_dim)
    bytes_in = sum(int(a.size) * a.dtype.itemsize for a in operands)
    bytes_out = B * out_dim * 4
    cost = pl.CostEstimate(flops=flops, transcendentals=0,
                           bytes_accessed=bytes_in + bytes_out)

    if B <= single_block_max:
        # Latency path: one block, no grid, everything in VMEM.
        full = lambda: pl.BlockSpec(memory_space=pltpu.VMEM)
        return pl.pallas_call(
            dqn_kernel,
            out_shape=out_shape,
            in_specs=[full() for _ in range(7)],
            out_specs=full(),
            cost_estimate=cost,
        )(*operands)

    # Throughput path: stream x over a batch grid; weights stay resident.
    tile = min(tile_b, _round_up(B, 8))
    ng = pl.cdiv(B, tile)
    if ng > 1 and ng % 2 == 1:
        # Keep an even number of grid steps so v7x's 2 TCs stay balanced
        # (harmless no-op on v5e/v6e single-TC parts).
        tile = _round_up(pl.cdiv(B, ng + 1), 8)
        ng = pl.cdiv(B, tile)

    resident = lambda shape: pl.BlockSpec(shape, lambda i: (0, 0))
    in_specs = [
        pl.BlockSpec((tile, d_in), lambda i: (i, 0)),   # x: streamed per tile
        resident(w1.shape), resident(b1.shape),
        resident(w2.shape), resident(b2.shape),
        resident(w3.shape), resident(b3.shape),
    ]
    out_specs = pl.BlockSpec((tile, out_dim), lambda i: (i, 0))
    return pl.pallas_call(
        dqn_kernel,
        out_shape=out_shape,
        grid=(ng,),
        in_specs=in_specs,
        out_specs=out_specs,
        compiler_params=pltpu.CompilerParams(
            dimension_semantics=("parallel",)),  # v7x: shard batch over 2 TCs
        cost_estimate=cost,
    )(*operands)


# ----------------------------- parameters ---------------------------------

def xavier_uniform(key, fan_in, fan_out, dtype=jnp.float32):
    # Matches nn.init.xavier_uniform_ (gain=1): U(-a, a), a = sqrt(6/(fan_in+fan_out)).
    # Stored as (in, out) so the kernel computes x @ W (== PyTorch x @ W.T).
    a = (6.0 / (fan_in + fan_out)) ** 0.5
    return jax.random.uniform(key, (fan_in, fan_out), dtype=dtype, minval=-a, maxval=a)


def make_params(key):
    """f32 master parameters (same init as the PyTorch module)."""
    k1, k2, k3 = jax.random.split(key, 3)
    w1 = xavier_uniform(k1, 200, 64)
    b1 = jnp.zeros((1, 64), jnp.float32)   # nn.init.constant_(bias, 0)
    w2 = xavier_uniform(k2, 64, 64)
    b2 = jnp.zeros((1, 64), jnp.float32)
    w3 = xavier_uniform(k3, 64, 6)
    b3 = jnp.zeros((1, 6), jnp.float32)
    return w1, b1, w2, b2, w3, b3


def cast_params(params, weight_dtype=jnp.bfloat16):
    """One-time cast: weights to the MXU compute dtype, biases stay f32.

    Done once at parameter-creation time so no convert ops run per forward
    call (they previously dominated the latency path).
    """
    w1, b1, w2, b2, w3, b3 = params
    return (w1.astype(weight_dtype), b1.astype(jnp.float32),
            w2.astype(weight_dtype), b2.astype(jnp.float32),
            w3.astype(weight_dtype), b3.astype(jnp.float32))


def reference_forward(x, w1, b1, w2, b2, w3, b3):
    h1 = jnp.maximum(x @ w1 + b1, 0.0)
    h2 = jnp.maximum(h1 @ w2 + b2, 0.0)
    return h2 @ w3 + b3


if __name__ == "__main__":
    key = jax.random.PRNGKey(0)
    kx, kp = jax.random.split(key)

    params_f32 = make_params(kp)                       # exact f32 params
    params_bf16 = cast_params(params_f32, jnp.bfloat16)  # pre-cast once

    # --- Small batch (latency path, single block), exact f32 check ---------
    B_small = 8
    x_small = jax.random.normal(kx, (B_small, 200), dtype=jnp.float32)
    ref_small = reference_forward(x_small, *params_f32)

    out_f32 = jax.block_until_ready(deep_q_network(x_small, *params_f32))
    assert out_f32.shape == (B_small, 6), out_f32.shape
    assert jnp.allclose(out_f32, ref_small, atol=1e-5, rtol=1e-5), \
        "f32 small-batch mismatch vs reference"

    # Same path with pre-cast bf16 weights (f32 accumulation) — relaxed tol.
    out_bf16 = jax.block_until_ready(deep_q_network(x_small, *params_bf16))
    assert jnp.allclose(out_bf16, ref_small, atol=5e-2, rtol=5e-2), \
        "bf16 small-batch mismatch vs reference"

    # --- Mid batch: still the single-block path (raised threshold) ---------
    B_mid = 1024
    x_mid = jax.random.normal(kx, (B_mid, 200), dtype=jnp.float32)
    ref_mid = reference_forward(x_mid, *params_f32)
    out_mid = jax.block_until_ready(deep_q_network(x_mid, *params_bf16))
    assert out_mid.shape == (B_mid, 6), out_mid.shape
    assert jnp.allclose(out_mid, ref_mid, atol=5e-2, rtol=5e-2), \
        "bf16 mid-batch (single block) mismatch vs reference"

    # --- Grid path exercised at small scale (force small thresholds) -------
    out_grid = jax.block_until_ready(
        deep_q_network(x_mid, *params_bf16, tile_b=256, single_block_max=256))
    assert out_grid.shape == (B_mid, 6), out_grid.shape
    assert jnp.allclose(out_grid, ref_mid, atol=5e-2, rtol=5e-2), \
        "bf16 batched-grid mismatch vs reference"

    print("KERNEL_OK")
</pallas_src>

<mosaic_0001>
module attributes {stable_mosaic.version = 11 : i64} {
  func.func @dqn_kernel(%arg0: memref<8x200xf32, #tpu.memory_space<vmem>>, %arg1: memref<200x64xf32, #tpu.memory_space<vmem>>, %arg2: memref<1x64xf32, #tpu.memory_space<vmem>>, %arg3: memref<64x64xf32, #tpu.memory_space<vmem>>, %arg4: memref<1x64xf32, #tpu.memory_space<vmem>>, %arg5: memref<64x6xf32, #tpu.memory_space<vmem>>, %arg6: memref<1x6xf32, #tpu.memory_space<vmem>>, %arg7: memref<8x6xf32, #tpu.memory_space<vmem>>) attributes {dimension_semantics = [], scalar_prefetch = 0 : i64, scratch_operands = 0 : i64, tpu.core_type = #tpu.core_type<tc>} {
    %c0 = arith.constant 0 : index
    %c0_0 = arith.constant 0 : index
    %0 = vector.load %arg0[%c0, %c0_0] : memref<8x200xf32, #tpu.memory_space<vmem>>, vector<8x200xf32>
    %c0_1 = arith.constant 0 : index
    %c0_2 = arith.constant 0 : index
    %1 = vector.load %arg1[%c0_1, %c0_2] : memref<200x64xf32, #tpu.memory_space<vmem>>, vector<200x64xf32>
    %cst = arith.constant dense<0.000000e+00> : vector<8x64xf32>
    %2 = tpu.matmul %0, %1, %cst {dimension_numbers = #tpu.dot_dimension_numbers<[1], [0], [0], [1], [0, 0, 1, 1], [], []>} : vector<8x200xf32>, vector<200x64xf32>, vector<8x64xf32> -> vector<8x64xf32>
    %c0_3 = arith.constant 0 : index
    %c0_4 = arith.constant 0 : index
    %3 = vector.load %arg2[%c0_3, %c0_4] : memref<1x64xf32, #tpu.memory_space<vmem>>, vector<1x64xf32>
    %4 = vector.broadcast %3 : vector<1x64xf32> to vector<8x64xf32>
    %5 = arith.addf %2, %4 : vector<8x64xf32>
    %cst_5 = arith.constant 0.000000e+00 : f32
    %6 = vector.broadcast %cst_5 : f32 to vector<8x64xf32>
    %7 = arith.maximumf %5, %6 : vector<8x64xf32>
    %c0_6 = arith.constant 0 : index
    %c0_7 = arith.constant 0 : index
    %8 = vector.load %arg3[%c0_6, %c0_7] : memref<64x64xf32, #tpu.memory_space<vmem>>, vector<64x64xf32>
    %cst_8 = arith.constant dense<0.000000e+00> : vector<8x64xf32>
    %9 = tpu.matmul %7, %8, %cst_8 {dimension_numbers = #tpu.dot_dimension_numbers<[1], [0], [0], [1], [0, 0, 1, 1], [], []>} : vector<8x64xf32>, vector<64x64xf32>, vector<8x64xf32> -> vector<8x64xf32>
    %c0_9 = arith.constant 0 : index
    %c0_10 = arith.constant 0 : index
    %10 = vector.load %arg4[%c0_9, %c0_10] : memref<1x64xf32, #tpu.memory_space<vmem>>, vector<1x64xf32>
    %11 = vector.broadcast %10 : vector<1x64xf32> to vector<8x64xf32>
    %12 = arith.addf %9, %11 : vector<8x64xf32>
    %cst_11 = arith.constant 0.000000e+00 : f32
    %13 = vector.broadcast %cst_11 : f32 to vector<8x64xf32>
    %14 = arith.maximumf %12, %13 : vector<8x64xf32>
    %c0_12 = arith.constant 0 : index
    %c0_13 = arith.constant 0 : index
    %15 = vector.load %arg5[%c0_12, %c0_13] : memref<64x6xf32, #tpu.memory_space<vmem>>, vector<64x6xf32>
    %cst_14 = arith.constant dense<0.000000e+00> : vector<8x6xf32>
    %16 = tpu.matmul %14, %15, %cst_14 {dimension_numbers = #tpu.dot_dimension_numbers<[1], [0], [0], [1], [0, 0, 1, 1], [], []>} : vector<8x64xf32>, vector<64x6xf32>, vector<8x6xf32> -> vector<8x6xf32>
    %c0_15 = arith.constant 0 : index
    %c0_16 = arith.constant 0 : index
    %17 = vector.load %arg6[%c0_15, %c0_16] : memref<1x6xf32, #tpu.memory_space<vmem>>, vector<1x6xf32>
    %18 = vector.broadcast %17 : vector<1x6xf32> to vector<8x6xf32>
    %19 = arith.addf %16, %18 : vector<8x6xf32>
    %c0_17 = arith.constant 0 : index
    %c0_18 = arith.constant 0 : index
    %20 = vector.load %arg7[%c0_17, %c0_18] : memref<8x6xf32, #tpu.memory_space<vmem>>, vector<8x6xf32>
    tpu.vector_store %arg7[%c0_17, %c0_18], %19 {strides = array<i32>} : memref<8x6xf32, #tpu.memory_space<vmem>>, vector<8x6xf32>,
    return
  }
}

</mosaic_0001>

<llo_original>
// kernel: tpu_custom_call.1
$region0: #{tpu_custom_call.1}
  #allocation0 [shape = 'u32[]', space=smem, size = 0x4, offset = 0x4, fixed_abs, tag = 'smem constant byte address 0x4 - core index']
  #allocation1 [shape = 'u32[72,128]{1,0:T(1,128)}', space=vmem, size = 0x9000, scoped, tag = 'internal scratch']
  %s0 = inlined_call_operand.vmem [shape: f32[8,200], index: 0, kind: input, shape index: {}]
  %s1 = inlined_call_operand.vmem [shape: f32[200,64], index: 1, kind: input, shape index: {}]
  %s2 = inlined_call_operand.vmem [shape: f32[1,64], index: 2, kind: input, shape index: {}]
  %s3 = inlined_call_operand.vmem [shape: f32[64,64], index: 3, kind: input, shape index: {}]
  %s4 = inlined_call_operand.vmem [shape: f32[1,64], index: 4, kind: input, shape index: {}]
  %s5 = inlined_call_operand.vmem [shape: f32[64,6], index: 5, kind: input, shape index: {}]
  %s6 = inlined_call_operand.vmem [shape: f32[1,6], index: 6, kind: input, shape index: {}]
  %s7 = inlined_call_operand.hbm [shape: f32[8,6], index: 7, kind: output, shape index: {}]
  %s8 = sld [smem:[#allocation0]]
  $region38: #{tpu_custom_call.1} parent=0
    _
  %s10 = ssub.s32 1, %s8
  %s11 = scalar_select 0, %s10, %s8
  $region1: #{tpu_custom_call.1} parent=0
    #allocation2 [shape = 'u8[4096]{0}', space=vmem, size = 0x1000, scoped, tag = 'output window, operand 0, single buffered']
    #allocation3 [shape = 's32[1]{0}', space=sflag, size = 0x4, scoped, tag = 'scoped memory for tpu_custom_call.1']
    %12 = vsyncpa [#allocation3], 0
    // Predicated region
    $region2: #{tpu_custom_call.1} parent=1 // pred_check
      _
    $region3: #{tpu_custom_call.1} parent=1 // pred_check_branch
      %14 = sbr.rel (0) target = $region5
    $region4: #{tpu_custom_call.1} parent=1 // pred_region
      _
    $region5: #{tpu_custom_call.1} parent=1 // pred_fallthru
      _
    // Predicated region
    $region6: #{tpu_custom_call.1} parent=1 // pred_check
      _
    $region7: #{tpu_custom_call.1} parent=1 // pred_check_branch
      %16 = sbr.rel (0) target = $region9
    $region8: #{tpu_custom_call.1} parent=1 // pred_region
      _
    $region9: #{tpu_custom_call.1} parent=1 // pred_fallthru
      _
    // Predicated region
    $region10: #{tpu_custom_call.1} parent=1 // pred_check
      _
    $region11: #{tpu_custom_call.1} parent=1 // pred_check_branch
      %18 = sbr.rel (0) target = $region13
    $region12: #{tpu_custom_call.1} parent=1 // pred_region
      _
    $region13: #{tpu_custom_call.1} parent=1 // pred_fallthru
      _
    // Predicated region
    $region14: #{tpu_custom_call.1} parent=1 // pred_check
      _
    $region15: #{tpu_custom_call.1} parent=1 // pred_check_branch
      %20 = sbr.rel (0) target = $region17
    $region16: #{tpu_custom_call.1} parent=1 // pred_region
      _
    $region17: #{tpu_custom_call.1} parent=1 // pred_fallthru
      _
    // Predicated region
    $region18: #{tpu_custom_call.1} parent=1 // pred_check
      _
    $region19: #{tpu_custom_call.1} parent=1 // pred_check_branch
      %22 = sbr.rel (0) target = $region21
    $region20: #{tpu_custom_call.1} parent=1 // pred_region
      _
    $region21: #{tpu_custom_call.1} parent=1 // pred_fallthru
      _
    // Predicated region
    $region22: #{tpu_custom_call.1} parent=1 // pred_check
      _
    $region23: #{tpu_custom_call.1} parent=1 // pred_check_branch
      %24 = sbr.rel (0) target = $region25
    $region24: #{tpu_custom_call.1} parent=1 // pred_region
      _
    $region25: #{tpu_custom_call.1} parent=1 // pred_fallthru
      _
    // Predicated region
    $region26: #{tpu_custom_call.1} parent=1 // pred_check
      _
    $region27: #{tpu_custom_call.1} parent=1 // pred_check_branch
      %26 = sbr.rel (0) target = $region29
    $region28: #{tpu_custom_call.1} parent=1 // pred_region
      _
    $region29: #{tpu_custom_call.1} parent=1 // pred_fallthru
      _
    %v27 = vld [vmem:[%s0] sm:$0xff]
    %v28 = vld [vmem:[%s0 + $0x8] sm:$0xff]
    %v29 = vld [vmem:[%s1] sm:$0xff]
    %v30 = vld [vmem:[%s1 + $0x8] sm:$0xff]
    %v31 = vld [vmem:[%s1 + $0x10] sm:$0xff]
    %v32 = vld [vmem:[%s1 + $0x18] sm:$0xff]
    %v33 = vld [vmem:[%s1 + $0x20] sm:$0xff]
    %v34 = vld [vmem:[%s1 + $0x28] sm:$0xff]
    %v35 = vld [vmem:[%s1 + $0x30] sm:$0xff]
    %v36 = vld [vmem:[%s1 + $0x38] sm:$0xff]
    %v37 = vld [vmem:[%s1 + $0x40] sm:$0xff]
    %v38 = vld [vmem:[%s1 + $0x48] sm:$0xff]
    %v39 = vld [vmem:[%s1 + $0x50] sm:$0xff]
    %v40 = vld [vmem:[%s1 + $0x58] sm:$0xff]
    %v41 = vld [vmem:[%s1 + $0x60] sm:$0xff]
    %v42 = vld [vmem:[%s1 + $0x68] sm:$0xff]
    %v43 = vld [vmem:[%s1 + $0x70] sm:$0xff]
    %v44 = vld [vmem:[%s1 + $0x78] sm:$0xff]
    %v45 = vld [vmem:[%s1 + $0x80] sm:$0xff]
    %v46 = vld [vmem:[%s1 + $0x88] sm:$0xff]
    %v47 = vld [vmem:[%s1 + $0x90] sm:$0xff]
    %v48 = vld [vmem:[%s1 + $0x98] sm:$0xff]
    %v49 = vld [vmem:[%s1 + $0xa0] sm:$0xff]
    %v50 = vld [vmem:[%s1 + $0xa8] sm:$0xff]
    %v51 = vld [vmem:[%s1 + $0xb0] sm:$0xff]
    %v52 = vld [vmem:[%s1 + $0xb8] sm:$0xff]
    %v53 = vld [vmem:[%s1 + $0xc0] sm:$0xff]
    %v54 = vld [vmem:[%s2] sm:$0x1]
    %v56 = vperm.slane %v54, 0
    %vm58 = vcmask 588800
    %v60 = vsel %vm58, %v28, 0
    %62 = vmatpush.msra.mxu0 %v44
    %63 = vmatpush.msra.mxu0 %v43
    %64 = vmatpush.msra.mxu0 %v42
    %65 = vmatpush.msra.mxu0 %v41
    %66 = vmatpush.msra.mxu0 %v40
    %67 = vmatpush.msra.mxu0 %v39
    %68 = vmatpush.msra.mxu0 %v38
    %69 = vmatpush.msra.mxu0 %v37
    %70 = vmatpush.msra.mxu0 %v36
    %71 = vmatpush.msra.mxu0 %v35
    %72 = vmatpush.msra.mxu0 %v34
    %73 = vmatpush.msra.mxu0 %v33
    %74 = vmatpush.msra.mxu0 %v32
    %75 = vmatpush.msra.mxu0 %v31
    %76 = vmatpush.msra.mxu0 %v30
    %77 = vmatpush.msra.mxu0 %v29
    %78 = vmatmul.f32.gmra.mxu0 %v27
    %v79 = vpop.f32.mrf.mxu0
    %v80 = vadd.f32 %v56, %v79
    %81 = vdwg.mxu0
    %82 = vmatpush.msra.mxu0 0.0
    %83 = vmatpush.msra.mxu0 0.0
    %84 = vmatpush.msra.mxu0 0.0
    %85 = vmatpush.msra.mxu0 0.0
    %86 = vmatpush.msra.mxu0 0.0
    %87 = vmatpush.msra.mxu0 0.0
    %88 = vmatpush.msra.mxu0 0.0
    %89 = vmatpush.msra.mxu0 %v53
    %90 = vmatpush.msra.mxu0 %v52
    %91 = vmatpush.msra.mxu0 %v51
    %92 = vmatpush.msra.mxu0 %v50
    %93 = vmatpush.msra.mxu0 %v49
    %94 = vmatpush.msra.mxu0 %v48
    %95 = vmatpush.msra.mxu0 %v47
    %96 = vmatpush.msra.mxu0 %v46
    %97 = vmatpush.msra.mxu0 %v45
    %98 = vmatmul.f32.gmra.mxu0 %v60
    %v99 = vpop.f32.mrf.mxu0
    %v100 = vadd.f32 %v80, %v99
    %101 = vdwg.mxu0
    %v102 = vmax.f32 %v100, 0.0
    %v103 = vld [vmem:[%s3] sm:$0xff]
    %v104 = vld [vmem:[%s3 + $0x8] sm:$0xff]
    %v105 = vld [vmem:[%s3 + $0x10] sm:$0xff]
    %v106 = vld [vmem:[%s3 + $0x18] sm:$0xff]
    %v107 = vld [vmem:[%s3 + $0x20] sm:$0xff]
    %v108 = vld [vmem:[%s3 + $0x28] sm:$0xff]
    %v109 = vld [vmem:[%s3 + $0x30] sm:$0xff]
    %v110 = vld [vmem:[%s3 + $0x38] sm:$0xff]
    %v111 = vld [vmem:[%s4] sm:$0x1]
    %v113 = vperm.slane %v111, 0
    %vm115 = vcmask 523264
    %v117 = vsel %vm115, %v102, 0
    %119 = vmatpush.msra.mxu0 0.0
    %120 = vmatpush.msra.mxu0 0.0
    %121 = vmatpush.msra.mxu0 0.0
    %122 = vmatpush.msra.mxu0 0.0
    %123 = vmatpush.msra.mxu0 0.0
    %124 = vmatpush.msra.mxu0 0.0
    %125 = vmatpush.msra.mxu0 0.0
    %126 = vmatpush.msra.mxu0 0.0
    %127 = vmatpush.msra.mxu0 %v110
    %128 = vmatpush.msra.mxu0 %v109
    %129 = vmatpush.msra.mxu0 %v108
    %130 = vmatpush.msra.mxu0 %v107
    %131 = vmatpush.msra.mxu0 %v106
    %132 = vmatpush.msra.mxu0 %v105
    %133 = vmatpush.msra.mxu0 %v104
    %134 = vmatpush.msra.mxu0 %v103
    %135 = vmatmul.f32.gmra.mxu0 %v117
    %v136 = vpop.f32.mrf.mxu0
    %v137 = vadd.f32 %v113, %v136
    %138 = vdwg.mxu0
    %v139 = vmax.f32 %v137, 0.0
    %v140 = vld [vmem:[%s5] sm:$0xff]
    %v141 = vld [vmem:[%s5 + $0x8] sm:$0xff]
    %v142 = vld [vmem:[%s5 + $0x10] sm:$0xff]
    %v143 = vld [vmem:[%s5 + $0x18] sm:$0xff]
    %v144 = vld [vmem:[%s5 + $0x20] sm:$0xff]
    %v145 = vld [vmem:[%s5 + $0x28] sm:$0xff]
    %v146 = vld [vmem:[%s5 + $0x30] sm:$0xff]
    %v147 = vld [vmem:[%s5 + $0x38] sm:$0xff]
    %v148 = vld [vmem:[%s6] sm:$0x1]
    %v150 = vperm.slane %v148, 0
    %v153 = vsel %vm115, %v139, 0
    %155 = vmatpush.msra.mxu0 0.0
    %156 = vmatpush.msra.mxu0 0.0
    %157 = vmatpush.msra.mxu0 0.0
    %158 = vmatpush.msra.mxu0 0.0
    %159 = vmatpush.msra.mxu0 0.0
    %160 = vmatpush.msra.mxu0 0.0
    %161 = vmatpush.msra.mxu0 0.0
    %162 = vmatpush.msra.mxu0 0.0
    %163 = vmatpush.msra.mxu0 %v147
    %164 = vmatpush.msra.mxu0 %v146
    %165 = vmatpush.msra.mxu0 %v145
    %166 = vmatpush.msra.mxu0 %v144
    %167 = vmatpush.msra.mxu0 %v143
    %168 = vmatpush.msra.mxu0 %v142
    %169 = vmatpush.msra.mxu0 %v141
    %170 = vmatpush.msra.mxu0 %v140
    %171 = vmatmul.f32.gmra.mxu0 %v153
    %v172 = vpop.f32.mrf.mxu0
    %v173 = vadd.f32 %v150, %v172
    %174 = vdwg.mxu0
    %vm175 = vcmask 48128
    %176 = vst.msk [vmem:[#allocation2] sm:$0xff] %vm175, %v173
    // Predicated region
    $region30: #{tpu_custom_call.1} parent=1 // pred_check
      _
    $region31: #{tpu_custom_call.1} parent=1 // pred_check_branch
      %178 = sbr.rel (0) target = $region33
    $region32: #{tpu_custom_call.1} parent=1 // pred_region
      %180 = vsyncadd [#allocation3], 0
      %s182 = sshll.u32 [#allocation2], 4
      %s183 = int_to_ptr.vmem [resolvable:$true] %s182
      %s184 = sshll.u32 %s7, 4
      %s185 = int_to_ptr.hbm [resolvable:$true] %s184
      %187 = dma.vmem_to_hbm [thread:$0]  %s183, 128, %s185, [#allocation3]
    $region33: #{tpu_custom_call.1} parent=1 // pred_fallthru
      _
    // Predicated region
    $region34: #{tpu_custom_call.1} parent=1 // pred_check
      _
    $region35: #{tpu_custom_call.1} parent=1 // pred_check_branch
      %189 = sbr.rel (0) target = $region37
    $region36: #{tpu_custom_call.1} parent=1 // pred_region
      %191 = dma.done [#allocation3], 128
    $region37: #{tpu_custom_call.1} parent=1 // pred_fallthru
      _
    %192 = vsyncpa [#allocation3], 1

</llo_original>
